<compile_context>
chip_gen: v5e
topology: v5e:2x2
jax: 0.10.0
libtpu: 0.0.40
codegen_flags: <defaults>
</compile_context>

<pallas_src>
import jax
import jax.numpy as jnp
from jax.experimental import pallas as pl
from jax.experimental.pallas import tpu as pltpu


def _choose_batch_tile(B, K, T, E, out_bytes, vmem_budget=24 * (1 << 20)):
    """Largest TB that divides B, fits a conservative double-buffered VMEM
    budget on every TPU generation, and (when B >= 2) leaves at least two grid
    steps so the 'parallel' batch axis can split across v7x's TensorCores."""
    resident = 2 * (E * K * 2) + 2 * (E * 128 * 4)   # weight (x2 buf) + lane-padded bias
    per_image = K * T * 2 + E * T * out_bytes        # bf16 im2col + output tile
    avail = max(vmem_budget - resident, 2 * per_image)
    tb_cap = max(1, avail // (2 * per_image))        # x2: double buffering
    if B >= 2:
        tb_cap = min(tb_cap, B // 2)                 # keep grid >= 2 (v7x megacore)
    tb_cap = max(int(tb_cap), 1)
    tb = 1
    for d in range(1, min(tb_cap, B) + 1):
        if B % d == 0:
            tb = d
    return tb


def _make_patch_embed_kernel(tb):
    def kernel(x_ref, w_ref, b_ref, o_ref):
        # x_ref: (TB, K, T) bf16   per-image im2col columns (K-major)
        # w_ref: (E, K)     bf16   Conv2d weight, flattened
        # b_ref: (E, 1)     f32    bias column
        # o_ref: (TB, E, T) out    NCHW-flat patch embeddings
        w = w_ref[...]
        b = b_ref[...]
        for i in range(tb):   # static unroll; TB is small
            acc = jnp.dot(w, x_ref[i], preferred_element_type=jnp.float32)  # (E, T) f32
            o_ref[i] = (acc + b).astype(o_ref.dtype)
    return kernel


def patch_embed_forward(x, weight, bias, patch_size, out_dtype=None):
    """Pallas PatchEmbed forward.

    Args:
      x:      (B, C, H, W)  float32, NCHW image (same as PyTorch).
      weight: (E, C, p, p)  float32, Conv2d weight.
      bias:   (E,)          float32, Conv2d bias.
      out_dtype: output dtype (default: x.dtype, matching the PyTorch module;
                 pass jnp.bfloat16 for bf16-activation models to halve output
                 HBM traffic).
    Returns:
      (B, E, H//p, W//p) NCHW patch embeddings.
    """
    B, C, H, W = x.shape
    E = weight.shape[0]
    p = patch_size
    nH, nW = H // p, W // p
    T = nH * nW
    K = C * p * p
    out_dtype = x.dtype if out_dtype is None else out_dtype
    out_bytes = jnp.dtype(out_dtype).itemsize

    # --- layout glue (single fused XLA pass): NCHW -> per-image K-major im2col.
    # Cast to bf16 BEFORE the transpose so it moves half the bytes.
    xc = x.astype(jnp.bfloat16).reshape(B, C, nH, p, nW, p)
    xc = jnp.transpose(xc, (0, 1, 3, 5, 2, 4)).reshape(B, K, T)     # (B, K, T)
    wk = weight.reshape(E, K).astype(jnp.bfloat16)                  # (E, K)
    bk = bias.astype(jnp.float32).reshape(E, 1)                     # (E, 1)

    TB = _choose_batch_tile(B, K, T, E, out_bytes)
    grid_b = B // TB

    # VMEM budget -> explicit limit (v5e default scoped VMEM is only ~16 MiB).
    per_image = K * T * 2 + E * T * out_bytes
    resident = 2 * (E * K * 2) + 2 * (E * 128 * 4)
    budget = 2 * TB * per_image + resident
    vmem_limit = int(min(max(budget + (4 << 20), 32 << 20), 112 << 20))

    cost = pl.CostEstimate(
        flops=2 * B * T * K * E,
        transcendentals=0,
        bytes_accessed=B * K * T * 2 + E * K * 2 + E * 4 + B * E * T * out_bytes,
    )

    out = pl.pallas_call(
        _make_patch_embed_kernel(TB),
        out_shape=jax.ShapeDtypeStruct((B, E, T), out_dtype),
        grid_spec=pltpu.PrefetchScalarGridSpec(
            num_scalar_prefetch=0,
            grid=(grid_b,),
            in_specs=[
                pl.BlockSpec((TB, K, T), lambda i: (i, 0, 0)),   # streamed activations
                pl.BlockSpec((E, K), lambda i: (0, 0)),          # resident weight
                pl.BlockSpec((E, 1), lambda i: (0, 0)),          # resident bias
            ],
            out_specs=pl.BlockSpec((TB, E, T), lambda i: (i, 0, 0)),
        ),
        compiler_params=pltpu.CompilerParams(
            dimension_semantics=("parallel",),   # megacore sharding on v7x
            vmem_limit_bytes=vmem_limit,
        ),
        cost_estimate=cost,
    )(xc, wk, bk)

    # (B, E, T) -> (B, E, nH, nW) is a contiguous reshape: no data movement.
    return out.reshape(B, E, nH, nW)


def reference_forward(x, weight, bias, patch_size):
    """Pure-JAX f32 reference (conv as strided patch matmul)."""
    B, C, H, W = x.shape
    E = weight.shape[0]
    p = patch_size
    nH, nW = H // p, W // p
    xp = x.reshape(B, C, nH, p, nW, p)
    xp = jnp.transpose(xp, (0, 2, 4, 1, 3, 5)).reshape(B * nH * nW, C * p * p)
    wp = weight.reshape(E, C * p * p).T
    out = xp @ wp + bias[None, :]
    return jnp.transpose(out.reshape(B, nH, nW, E), (0, 3, 1, 2))


if __name__ == "__main__":
    # Small shapes consistent with the module: img_size=16, patch_size=4,
    # in_chans=4, embed_dim=32  -> num_patches = 16.
    B, C, img_size, patch_size, embed_dim = 2, 4, 16, 4, 32

    key = jax.random.PRNGKey(0)
    kx, kw, kb = jax.random.split(key, 3)

    x = jax.random.normal(kx, (B, C, img_size, img_size), dtype=jnp.float32)
    # Deterministic synthetic Conv2d parameters (shape from nn.Conv2d(C, E, p, p)).
    weight = jax.random.normal(kw, (embed_dim, C, patch_size, patch_size),
                               dtype=jnp.float32) * 0.02
    bias = jax.random.normal(kb, (embed_dim,), dtype=jnp.float32) * 0.02

    out = patch_embed_forward(x, weight, bias, patch_size)
    out = jax.block_until_ready(out)

    ref = reference_forward(x, weight, bias, patch_size)
    assert out.shape == (B, embed_dim, img_size // patch_size, img_size // patch_size)
    # bf16 MXU inputs with f32 accumulation: loosen tolerance vs the f32 reference.
    assert jnp.allclose(out, ref, atol=2e-2, rtol=2e-2)

    print("KERNEL_OK")
</pallas_src>

<mosaic_0001>
module attributes {stable_mosaic.version = 11 : i64} {
  func.func @kernel(%arg0: i32, %arg1: memref<1x64x16xbf16, #tpu.memory_space<vmem>>, %arg2: memref<32x64xbf16, #tpu.memory_space<vmem>>, %arg3: memref<32x1xf32, #tpu.memory_space<vmem>>, %arg4: memref<1x32x16xf32, #tpu.memory_space<vmem>>) attributes {dimension_semantics = [#tpu.dimension_semantics<parallel>], iteration_bounds = array<i64: 2>, scalar_prefetch = 0 : i64, scratch_operands = 0 : i64, tpu.core_type = #tpu.core_type<tc>, window_params = [{transform_indices = @transform_0, window_bounds = array<i64: 1, 64, 16>}, {pipeline_mode = #tpu.pipeline_mode<synchronous>, transform_indices = @transform_1, window_bounds = array<i64: 32, 64>}, {pipeline_mode = #tpu.pipeline_mode<synchronous>, transform_indices = @transform_2, window_bounds = array<i64: 32, 1>}, {transform_indices = @transform_3, window_bounds = array<i64: 1, 32, 16>}]} {
    %c0 = arith.constant 0 : index
    %c0_0 = arith.constant 0 : index
    %0 = vector.load %arg2[%c0, %c0_0] : memref<32x64xbf16, #tpu.memory_space<vmem>>, vector<32x64xbf16>
    %c0_1 = arith.constant 0 : index
    %c0_2 = arith.constant 0 : index
    %1 = vector.load %arg3[%c0_1, %c0_2] : memref<32x1xf32, #tpu.memory_space<vmem>>, vector<32x1xf32>
    %c0_3 = arith.constant 0 : index
    %c0_4 = arith.constant 0 : index
    %c0_5 = arith.constant 0 : index
    %2 = vector.load %arg1[%c0_3, %c0_4, %c0_5] : memref<1x64x16xbf16, #tpu.memory_space<vmem>>, vector<1x64x16xbf16>
    %3 = vector.shape_cast %2 : vector<1x64x16xbf16> to vector<64x16xbf16>
    %cst = arith.constant dense<0.000000e+00> : vector<32x16xf32>
    %4 = tpu.matmul %0, %3, %cst {dimension_numbers = #tpu.dot_dimension_numbers<[1], [0], [0], [1], [0, 0, 1, 1], [], []>} : vector<32x64xbf16>, vector<64x16xbf16>, vector<32x16xf32> -> vector<32x16xf32>
    %5 = vector.broadcast %1 : vector<32x1xf32> to vector<32x16xf32>
    %6 = arith.addf %4, %5 : vector<32x16xf32>
    %c0_6 = arith.constant 0 : index
    %c0_7 = arith.constant 0 : index
    %c0_8 = arith.constant 0 : index
    %7 = vector.load %arg4[%c0_6, %c0_7, %c0_8] : memref<1x32x16xf32, #tpu.memory_space<vmem>>, vector<1x32x16xf32>
    %8 = vector.shape_cast %7 : vector<1x32x16xf32> to vector<32x16xf32>
    %9 = vector.shape_cast %6 : vector<32x16xf32> to vector<1x32x16xf32>
    tpu.vector_store %arg4[%c0_6, %c0_7, %c0_8], %9 {strides = array<i32>} : memref<1x32x16xf32, #tpu.memory_space<vmem>>, vector<1x32x16xf32>,
    return
  }
  func.func @transform_0(%arg0: i32) -> (i32, i32, i32) {
    %c0_i32 = arith.constant 0 : i32
    %c0_i32_0 = arith.constant 0 : i32
    %c0_i32_1 = arith.constant 0 : i32
    return %arg0, %c0_i32, %c0_i32_0 : i32, i32, i32
  }
  func.func @transform_1(%arg0: i32) -> (i32, i32) {
    %c0_i32 = arith.constant 0 : i32
    %c0_i32_0 = arith.constant 0 : i32
    %c0_i32_1 = arith.constant 0 : i32
    return %c0_i32, %c0_i32_0 : i32, i32
  }
  func.func @transform_2(%arg0: i32) -> (i32, i32) {
    %c0_i32 = arith.constant 0 : i32
    %c0_i32_0 = arith.constant 0 : i32
    %c0_i32_1 = arith.constant 0 : i32
    return %c0_i32, %c0_i32_0 : i32, i32
  }
  func.func @transform_3(%arg0: i32) -> (i32, i32, i32) {
    %c0_i32 = arith.constant 0 : i32
    %c0_i32_0 = arith.constant 0 : i32
    %c0_i32_1 = arith.constant 0 : i32
    return %arg0, %c0_i32, %c0_i32_0 : i32, i32, i32
  }
}

</mosaic_0001>

<llo_original>
// kernel: tpu_custom_call.1
$region0: #{tpu_custom_call.1}
  #allocation0 [shape = 'u32[]', space=smem, size = 0x4, offset = 0x4, fixed_abs, tag = 'smem constant byte address 0x4 - core index']
  #allocation1 [shape = 'u32[72,128]{1,0:T(1,128)}', space=vmem, size = 0x9000, scoped, tag = 'internal scratch']
  %s0 = inlined_call_operand.vmem [shape: bf16[2,64,16], index: 0, kind: input, shape index: {}]
  %s1 = inlined_call_operand.vmem [shape: bf16[32,64], index: 1, kind: input, shape index: {}]
  %s2 = inlined_call_operand.vmem [shape: f32[32,1], index: 2, kind: input, shape index: {}]
  %s3 = inlined_call_operand.vmem [shape: f32[2,32,16], index: 3, kind: output, shape index: {}]
  %s4 = sld [smem:[#allocation0]]
  $region45: #{tpu_custom_call.1} parent=0
    _
  %s6 = ssub.s32 1, %s4
  %s7 = scalar_select 0, %s6, %s4
  loop: start=0, step=1, limit=4
  $region2: #{tpu_custom_call.1} parent=0 // loop_pre_header
    _
  $region3: #{tpu_custom_call.1} parent=0 // loop_header
    %s9 = sphi 0, %s13
    %p10 = scmp.ge.s32.totalorder %s9, 4
    %s19 = sphi 0, %s21
    %s22 = sphi 0, %s19
    %s23 = sphi 0, %s22
    %s39 = sphi 0, %s23
    %s43 = sphi 0, %s43
    %s45 = sphi 0, %s43
    %s46 = sphi 0, %s45
    %s60 = sphi 0, %s46
    %s64 = sphi 0, %s64
    %s66 = sphi 0, %s64
    %s67 = sphi 0, %s66
    %s81 = sphi 0, %s67
    %s87 = sphi 0, %s89
    %s90 = sphi 0, %s87
    %s91 = sphi 0, %s90
    %s107 = sphi 0, %s91
  $region4: #{tpu_custom_call.1} parent=0 // loop_header_branch
    %12 = sbr.rel (%p10) target = $region8
  $region5: #{tpu_custom_call.1} parent=0 // loop_body
    %s14 = ssub.s32 %s9, 1
    %s15 = ssub.s32 %s9, 2
    %s16 = sadd.s32 %s9, 1
    %s17 = ssub.s32 %s9, %s16
    %p18 = scmp.eq.s32.totalorder %s17, 0
    %s20 = sadd.s32 %s19, 1
    %s21 = scalar_select %p18, %s19, %s20
    %p24 = pneg %p18
    %p25 = scmp.eq.s32.totalorder %s9, 1
    %p26 = por %p24, %p25
    %p27 = scmp.ne.s32.totalorder %s19, %s22
    %p28 = scmp.eq.s32.totalorder %s9, 0
    %p29 = por %p27, %p28
    %p30 = scmp.ne.s32.totalorder %s19, %s22
    %p31 = scmp.eq.s32.totalorder %s14, 1
    %p32 = por %p30, %p31
    %p33 = scmp.ne.s32.totalorder %s22, %s23
    %p34 = scmp.eq.s32.totalorder %s14, 0
    %p35 = por %p33, %p34
    %p36 = scmp.ne.s32.totalorder %s22, %s23
    %p37 = scmp.eq.s32.totalorder %s15, 1
    %p38 = por %p36, %p37
    %p40 = scmp.ne.s32.totalorder %s23, %s39
    %p41 = scmp.eq.s32.totalorder %s15, 0
    %p42 = por %p40, %p41
    %s44 = sadd.s32 %s43, 1
    %p47 = scmp.eq.s32.totalorder %s9, 1
    %p48 = scmp.ne.s32.totalorder %s43, %s45
    %p49 = scmp.eq.s32.totalorder %s9, 0
    %p50 = por %p48, %p49
    %p51 = scmp.ne.s32.totalorder %s43, %s45
    %p52 = scmp.eq.s32.totalorder %s14, 1
    %p53 = por %p51, %p52
    %p54 = scmp.ne.s32.totalorder %s45, %s46
    %p55 = scmp.eq.s32.totalorder %s14, 0
    %p56 = por %p54, %p55
    %p57 = scmp.ne.s32.totalorder %s45, %s46
    %p58 = scmp.eq.s32.totalorder %s15, 1
    %p59 = por %p57, %p58
    %p61 = scmp.ne.s32.totalorder %s46, %s60
    %p62 = scmp.eq.s32.totalorder %s15, 0
    %p63 = por %p61, %p62
    %s65 = sadd.s32 %s64, 1
    %p68 = scmp.eq.s32.totalorder %s9, 1
    %p69 = scmp.ne.s32.totalorder %s64, %s66
    %p70 = scmp.eq.s32.totalorder %s9, 0
    %p71 = por %p69, %p70
    %p72 = scmp.ne.s32.totalorder %s64, %s66
    %p73 = scmp.eq.s32.totalorder %s14, 1
    %p74 = por %p72, %p73
    %p75 = scmp.ne.s32.totalorder %s66, %s67
    %p76 = scmp.eq.s32.totalorder %s14, 0
    %p77 = por %p75, %p76
    %p78 = scmp.ne.s32.totalorder %s66, %s67
    %p79 = scmp.eq.s32.totalorder %s15, 1
    %p80 = por %p78, %p79
    %p82 = scmp.ne.s32.totalorder %s67, %s81
    %p83 = scmp.eq.s32.totalorder %s15, 0
    %p84 = por %p82, %p83
    %s85 = ssub.s32 %s9, %s16
    %p86 = scmp.eq.s32.totalorder %s85, 0
    %s88 = sadd.s32 %s87, 1
    %s89 = scalar_select %p86, %s87, %s88
    %p92 = pneg %p86
    %p93 = scmp.eq.s32.totalorder %s9, 1
    %p94 = por %p92, %p93
    %p95 = scmp.ne.s32.totalorder %s87, %s90
    %p96 = scmp.eq.s32.totalorder %s9, 0
    %p97 = por %p95, %p96
    %p98 = scmp.ne.s32.totalorder %s87, %s90
    %p99 = scmp.eq.s32.totalorder %s14, 1
    %p100 = por %p98, %p99
    %p101 = scmp.ne.s32.totalorder %s90, %s91
    %p102 = scmp.eq.s32.totalorder %s14, 0
    %p103 = por %p101, %p102
    %p104 = scmp.ne.s32.totalorder %s90, %s91
    %p105 = scmp.eq.s32.totalorder %s15, 1
    %p106 = por %p104, %p105
    %p108 = scmp.ne.s32.totalorder %s91, %s107
    %p109 = scmp.eq.s32.totalorder %s15, 0
    %p110 = por %p108, %p109
    %p111 = scmp.le.s32.totalorder 1, %s9
    %p112 = scmp.lt.s32.totalorder %s9, 3
    %p113 = pnand %p111, %p112
    %p114 = pneg %p113
    // Predicated region
    $region9: #{tpu_custom_call.1} parent=5 // pred_check
      _
    $region10: #{tpu_custom_call.1} parent=5 // pred_check_branch
      %116 = sbr.rel (%p113) target = $region12
    $region11: #{tpu_custom_call.1} parent=5 // pred_region
      %s117 = ssub.s32 %s9, 1
      // Predicated region
      $region13: #{tpu_custom_call.1} parent=11 // pred_check
        %p118 = pneg %p56
      $region14: #{tpu_custom_call.1} parent=11 // pred_check_branch
        %120 = sbr.rel (%p118) target = $region16
      $region15: #{tpu_custom_call.1} parent=11 // pred_region
        _
      $region16: #{tpu_custom_call.1} parent=11 // pred_fallthru
        _
      // Predicated region
      $region17: #{tpu_custom_call.1} parent=11 // pred_check
        %p121 = pneg %p77
      $region18: #{tpu_custom_call.1} parent=11 // pred_check_branch
        %123 = sbr.rel (%p121) target = $region20
      $region19: #{tpu_custom_call.1} parent=11 // pred_region
        _
      $region20: #{tpu_custom_call.1} parent=11 // pred_fallthru
        _
    $region12: #{tpu_custom_call.1} parent=5 // pred_fallthru
      _
    %p124 = scmp.lt.s32.totalorder %s9, 2
    // Predicated region
    $region21: #{tpu_custom_call.1} parent=5 // pred_check
      %p125 = pneg %p124
    $region22: #{tpu_custom_call.1} parent=5 // pred_check_branch
      %127 = sbr.rel (%p125) target = $region24
    $region23: #{tpu_custom_call.1} parent=5 // pred_region
      // Predicated region
      $region25: #{tpu_custom_call.1} parent=23 // pred_check
        %p128 = pneg %p29
      $region26: #{tpu_custom_call.1} parent=23 // pred_check_branch
        %130 = sbr.rel (%p128) target = $region28
      $region27: #{tpu_custom_call.1} parent=23 // pred_region
        %p131 = scmp.lt.s32.totalorder %s9, 1
        %s132 = scalar_select %p131, %s9, 1
        %s133 = smul.addr %s132, 8
        %s134 = smul.addr %s133, 4
        %s135 = scalar_lea.vmem %s0, %s134
      $region28: #{tpu_custom_call.1} parent=23 // pred_fallthru
        _
    $region24: #{tpu_custom_call.1} parent=5 // pred_fallthru
      _
    %p136 = scmp.le.s32.totalorder 1, %s9
    %p137 = scmp.lt.s32.totalorder %s9, 3
    %p138 = pnand %p136, %p137
    %p139 = pneg %p138
    // Predicated region
    $region29: #{tpu_custom_call.1} parent=5 // pred_check
      _
    $region30: #{tpu_custom_call.1} parent=5 // pred_check_branch
      %141 = sbr.rel (%p138) target = $region32
    $region31: #{tpu_custom_call.1} parent=5 // pred_region
      %s142 = ssub.s32 %s9, 1
      %p143 = scmp.lt.s32.totalorder %s14, 1
      %s144 = scalar_select %p143, %s14, 1
      %s145 = smul.addr %s144, 8
      %s146 = smul.addr %s145, 4
      %s147 = scalar_lea.vmem %s0, %s146
      %p148 = pneg %p35
      %p149 = pneg %p32
      %p150 = pneg %p56
      %p151 = pneg %p53
      %p152 = pneg %p77
      %p153 = pneg %p74
      %p154 = pneg %p103
      %p155 = pneg %p100
      %p156 = scmp.lt.s32.totalorder %s14, 1
      %s157 = scalar_select %p156, %s14, 1
      %s158 = smul.addr %s157, 4
      %s159 = smul.addr %s158, 8
      %s160 = scalar_lea.vmem %s3, %s159
      %p161 = scmp.lt.s32.totalorder %s14, 1
      %s162 = scalar_select %p161, %s14, 1
      %s163 = smul.addr %s162, 8
      %s164 = smul.addr %s163, 4
      %s165 = scalar_lea.vmem %s0, %s164
      %p166 = scmp.lt.s32.totalorder %s14, 1
      %s167 = scalar_select %p166, %s14, 1
      %s168 = smul.addr %s167, 4
      %s169 = smul.addr %s168, 8
      %s170 = scalar_lea.vmem %s3, %s169
      %v172 = vld [vmem:[%s1] sm:$0xf]
      %v173 = vld [vmem:[%s1 + $0x4] sm:$0xf]
      %v174 = vld [vmem:[%s1 + $0x8] sm:$0xf]
      %v175 = vld [vmem:[%s1 + $0xc] sm:$0xf]
      %v176 = vld [vmem:[%s2] sm:$0xff]
      %v177 = vld [vmem:[%s2 + $0x8] sm:$0xff]
      %v178 = vld [vmem:[%s2 + $0x10] sm:$0xff]
      %v179 = vld [vmem:[%s2 + $0x18] sm:$0xff]
      %v180 = vld [vmem:[%s165] sm:$0xf]
      %v181 = vld [vmem:[%s165 + $0x4] sm:$0xf]
      %v182 = vld [vmem:[%s165 + $0x8] sm:$0xf]
      %v183 = vld [vmem:[%s165 + $0xc] sm:$0xf]
      %v184 = vld [vmem:[%s165 + $0x10] sm:$0xf]
      %v185 = vld [vmem:[%s165 + $0x14] sm:$0xf]
      %v186 = vld [vmem:[%s165 + $0x18] sm:$0xf]
      %v187 = vld [vmem:[%s165 + $0x1c] sm:$0xf]
      %189 = vset.pattern.permute.xlu0 0
      %190 = vperm.xlu0 %189, %v176
      %v191 = vpop.permute.xlu0 %190
      %194 = vset.pattern.permute.xlu0 0
      %195 = vperm.xlu0 %194, %v177
      %v196 = vpop.permute.xlu0 %195
      %199 = vset.pattern.permute.xlu0 0
      %200 = vperm.xlu0 %199, %v178
      %v201 = vpop.permute.xlu0 %200
      %204 = vset.pattern.permute.xlu0 0
      %205 = vperm.xlu0 %204, %v179
      %v206 = vpop.permute.xlu0 %205
      %v212 = vunpack.c.l.b16 %v172
      %v213 = vunpack.c.l.b16 %v173
      %v214 = vunpack.c.l.b16 %v174
      %v215 = vunpack.c.l.b16 %v175
      %v216 = vpack.c.b16 %v213, %v212
      %v217 = vpack.c.b16 %v215, %v214
      %v226 = vunpack.c.l.b16 %v180
      %v227 = vunpack.c.l.b16 %v181
      %v228 = vunpack.c.l.b16 %v182
      %v229 = vunpack.c.l.b16 %v183
      %v230 = vunpack.c.l.b16 %v184
      %v231 = vunpack.c.l.b16 %v185
      %v232 = vunpack.c.l.b16 %v186
      %v233 = vunpack.c.l.b16 %v187
      %v234 = vpack.c.b16 %v227, %v226
      %v235 = vpack.c.b16 %v229, %v228
      %v236 = vpack.c.b16 %v231, %v230
      %v237 = vpack.c.b16 %v233, %v232
      %vm242 = vcmask 523264
      %v244 = vsel %vm242, %v216, 0
      %v247 = vsel %vm242, %v217, 0
      %249 = vmatpush.bf16.msra.mxu0 0
      %250 = vmatpush.bf16.msra.mxu0 0
      %251 = vmatpush.bf16.msra.mxu0 0
      %252 = vmatpush.bf16.msra.mxu0 0
      %253 = vmatpush.bf16.msra.mxu0 %v237
      %254 = vmatpush.bf16.msra.mxu0 %v236
      %255 = vmatpush.bf16.msra.mxu0 %v235
      %256 = vmatpush.bf16.msra.mxu0 %v234
      %257 = vmatmul.bf16.gmra.mxu0 %v244
      %v258 = vpop.f32.mrf.mxu0
      %v259 = vadd.f32 %v191, %v258
      %v260 = vpop.f32.mrf.mxu0
      %v261 = vadd.f32 %v196, %v260
      %262 = vmatmul.bf16.gmra.mxu0 %v247
      %v263 = vpop.f32.mrf.mxu0
      %v264 = vadd.f32 %v201, %v263
      %v265 = vpop.f32.mrf.mxu0
      %v266 = vadd.f32 %v206, %v265
      %267 = vdwg.mxu0
      %vm268 = vcmask 130048
      %269 = vst.msk [vmem:[%s170] sm:$0xff] %vm268, %v259
      %270 = vst.msk [vmem:[%s170 + $0x8] sm:$0xff] %vm268, %v261
      %271 = vst.msk [vmem:[%s170 + $0x10] sm:$0xff] %vm268, %v264
      %272 = vst.msk [vmem:[%s170 + $0x18] sm:$0xff] %vm268, %v266
      %p273 = scmp.lt.s32.totalorder %s14, 1
      %s274 = scalar_select %p273, %s14, 1
      %s275 = smul.addr %s274, 4
      %s276 = smul.addr %s275, 8
      %s277 = scalar_lea.vmem %s3, %s276
      // Predicated region
      $region33: #{tpu_custom_call.1} parent=31 // pred_check
        %p278 = pneg %p100
      $region34: #{tpu_custom_call.1} parent=31 // pred_check_branch
        %280 = sbr.rel (%p278) target = $region36
      $region35: #{tpu_custom_call.1} parent=31 // pred_region
        _
      $region36: #{tpu_custom_call.1} parent=31 // pred_fallthru
        _
    $region32: #{tpu_custom_call.1} parent=5 // pred_fallthru
      _
    %p281 = scmp.le.s32.totalorder 2, %s9
    // Predicated region
    $region37: #{tpu_custom_call.1} parent=5 // pred_check
      %p282 = pneg %p281
    $region38: #{tpu_custom_call.1} parent=5 // pred_check_branch
      %284 = sbr.rel (%p282) target = $region40
    $region39: #{tpu_custom_call.1} parent=5 // pred_region
      %s285 = ssub.s32 %s9, 2
      // Predicated region
      $region41: #{tpu_custom_call.1} parent=39 // pred_check
        %p286 = pneg %p106
      $region42: #{tpu_custom_call.1} parent=39 // pred_check_branch
        %288 = sbr.rel (%p286) target = $region44
      $region43: #{tpu_custom_call.1} parent=39 // pred_region
        %p289 = scmp.lt.s32.totalorder %s15, 1
        %s290 = scalar_select %p289, %s15, 1
        %s291 = smul.addr %s290, 4
        %s292 = smul.addr %s291, 8
        %s293 = scalar_lea.vmem %s3, %s292
      $region44: #{tpu_custom_call.1} parent=39 // pred_fallthru
        _
    $region40: #{tpu_custom_call.1} parent=5 // pred_fallthru
      _
  $region6: #{tpu_custom_call.1} parent=0 // loop_footer
    %s13 = sadd.s32 1, %s9
  $region7: #{tpu_custom_call.1} parent=0 // loop_footer_branch
    %8 = sbr.rel target = $region3
  $region8: #{tpu_custom_call.1} parent=0 // loop_exit
    _

</llo_original>
